<compile_context>
chip_gen: v7x
topology: tpu7x:2x2x1
jax: 0.10.0
libtpu: 0.0.40
codegen_flags: <defaults>
</compile_context>

<pallas_src>
import functools

import jax
import jax.numpy as jnp
from jax.experimental import pallas as pl
from jax.experimental.pallas import tpu as pltpu

MIN_NORM = 1e-15
ARTANH_EPS = 1e-6   # f32-safe (1e-15 rounds to 0 in float32)


def _edge_predictor_kernel(h_ref, wsrc_ref, wdst_ref, bcomb_ref,
                           wout_ref, bout_ref, out_ref, *, c, approx):
    G, TM, D = h_ref.shape                      # (neg+2, edge tile, dim_in)
    h = h_ref[...]
    if h.dtype != jnp.float32:                  # bf16 input -> f32 math
        h = h.astype(jnp.float32)

    # ---- PoincareBall logmap0 (+ proj_tan0 = identity), f32 ----------------
    sqrt_c = jnp.float32(c) ** 0.5
    norm = jnp.sqrt(jnp.sum(h * h, axis=-1, keepdims=True))
    norm = jnp.maximum(norm, MIN_NORM)
    z = jnp.clip(sqrt_c * norm, -1.0 + ARTANH_EPS, 1.0 - ARTANH_EPS)
    # artanh(z) = 0.5*log((1+z)/(1-z)); divides go to the EUP when approx=True.
    artanh = 0.5 * jnp.log((1.0 + z) * pl.reciprocal(1.0 - z, approx=approx))
    scale = artanh * pl.reciprocal(sqrt_c * norm, approx=approx)
    hl = scale * h                              # (G, TM, D), tangent at origin

    mm_dtype = wsrc_ref.dtype                   # bf16 (default) or f32
    hl_src = hl[0].astype(mm_dtype)                            # (TM, D)
    hl_dst = hl[1:].reshape((G - 1) * TM, D).astype(mm_dtype)  # fused dst rows

    # ---- src_fc and fused dst_fc (single MXU dot over all dst rows) --------
    h_src = jnp.dot(hl_src, wsrc_ref[...],
                    preferred_element_type=jnp.float32)         # (TM, D) f32
    h_dst = jnp.dot(hl_dst, wdst_ref[...],
                    preferred_element_type=jnp.float32).reshape(G - 1, TM, D)

    # ---- edge features: broadcast h_src, single combined bias, ReLU --------
    h_edge = jnp.maximum(h_src[None, :, :] + h_dst + bcomb_ref[...], 0.0)

    # ---- out_fc as VPU multiply + lane reduce; lane-dense score slab --------
    wout_row = wout_ref[...]                                    # (1, D) f32
    bout = bout_ref[0, 0]                                       # scalar (SMEM)
    scores = jnp.sum(h_edge * wout_row, axis=-1) + bout         # (G-1, TM)
    out_ref[...] = scores.astype(out_ref.dtype)


def _default_vmem_limit():
    """Generation-aware scoped-VMEM ceiling (headroom for Mosaic scratch)."""
    try:
        cap = int(pltpu.get_tpu_info().vmem_capacity_bytes)
    except Exception:
        cap = 128 << 20
    if cap <= (64 << 20):          # v7x-class: 64 MiB per TensorCore
        return 44 << 20
    return 96 << 20                # v5e/v6e: 128 MiB


def edge_predictor_forward(h, params, *, c, neg_samples=1,
                           matmul_dtype=jnp.bfloat16, block_m=None):
    """h: (N, D) float32 with N divisible by (neg_samples + 2)."""
    N, D = h.shape
    G = neg_samples + 2
    assert N % G == 0, "N must be divisible by neg_samples + 2"
    num_edge = N // G

    # bf16 path (default): halve HBM read bytes + approx EUP reciprocals.
    # float32 path: bit-tight checking against the f32 reference.
    use_f32 = (matmul_dtype == jnp.float32)
    in_dtype = jnp.float32 if use_f32 else jnp.bfloat16
    approx = not use_f32

    h3 = h.reshape(G, num_edge, D).astype(in_dtype)   # (group, edge, D)

    # Weights pre-transposed to (in, out); biases folded: b_comb = b_src+b_dst.
    wsrc_t = params["w_src"].T.astype(matmul_dtype)              # (D, D)
    wdst_t = params["w_dst"].T.astype(matmul_dtype)              # (D, D)
    wout_row = params["w_out"].reshape(1, D).astype(jnp.float32)
    bcomb = (params["b_src"] + params["b_dst"]).reshape(1, D).astype(jnp.float32)
    bout = params["b_out"].reshape(1, 1).astype(jnp.float32)     # -> SMEM scalar

    vmem_limit = _default_vmem_limit()
    in_item = jnp.dtype(in_dtype).itemsize
    w_item = jnp.dtype(matmul_dtype).itemsize

    def tile_bytes(tm):
        io = 2 * (G * tm * D * in_item) + 2 * ((G - 1) * tm * 4)  # dbl-buffered
        tmp = 6 * (G - 1) * tm * D * 4                            # f32 temps
        wts = 2 * D * D * w_item + 4 * D * 4
        return io + tmp + wts

    # Edge-tile size: biggest lane-friendly tile whose footprint fits VMEM.
    if block_m is None:
        if num_edge <= 128:
            block_m = num_edge                  # single (full) block
        else:
            block_m = 128
            for cand in (2048, 1024, 512, 256, 128):
                if cand <= num_edge and tile_bytes(cand) <= vmem_limit // 2:
                    block_m = cand
                    break
    TM = block_m

    # Tail handling: grid = cdiv(num_edge, TM) with a zero-padded tail tile.
    num_tiles = -(-num_edge // TM)
    padded_edges = num_tiles * TM
    if padded_edges != num_edge:
        h3 = jnp.pad(h3, ((0, 0), (0, padded_edges - num_edge), (0, 0)))
    grid = (num_tiles,)

    kernel = functools.partial(_edge_predictor_kernel, c=float(c), approx=approx)

    scores = pl.pallas_call(
        kernel,
        grid=grid,
        in_specs=[
            pl.BlockSpec((G, TM, D), lambda i: (0, i, 0)),       # h tile
            pl.BlockSpec((D, D), lambda i: (0, 0)),              # w_src (resident)
            pl.BlockSpec((D, D), lambda i: (0, 0)),              # w_dst (resident)
            pl.BlockSpec((1, D), lambda i: (0, 0)),              # b_src + b_dst
            pl.BlockSpec((1, D), lambda i: (0, 0)),              # w_out row
            pl.BlockSpec(memory_space=pltpu.MemorySpace.SMEM),   # b_out scalar
        ],
        out_specs=pl.BlockSpec((G - 1, TM), lambda i: (0, i)),   # lane-dense scores
        out_shape=jax.ShapeDtypeStruct((G - 1, padded_edges), jnp.float32),
        compiler_params=pltpu.CompilerParams(
            dimension_semantics=("parallel",),
            vmem_limit_bytes=int(vmem_limit)),
    )(h3, wsrc_t, wdst_t, bcomb, wout_row, bout)

    scores = scores[:, :num_edge]
    # Back to the PyTorch output layout: (num_edge, 1) and (neg*num_edge, 1).
    pos = scores[0].reshape(num_edge, 1)
    neg = scores[1:].reshape(neg_samples * num_edge, 1)
    return pos, neg


def _reference_forward(h, params, *, c, neg_samples=1):
    """Pure-JAX (f32) reference mirroring the PyTorch module."""
    N, D = h.shape
    num_edge = N // (neg_samples + 2)
    sqrt_c = c ** 0.5
    norm = jnp.maximum(jnp.linalg.norm(h, axis=-1, keepdims=True), MIN_NORM)
    z = jnp.clip(sqrt_c * norm, -1.0 + ARTANH_EPS, 1.0 - ARTANH_EPS)
    hl = (jnp.arctanh(z) / (sqrt_c * norm)) * h

    lin = lambda v, w, b: v @ w.T + b
    h_src = lin(hl[:num_edge], params["w_src"], params["b_src"])
    h_pos_dst = lin(hl[num_edge:2 * num_edge], params["w_dst"], params["b_dst"])
    h_neg_dst = lin(hl[2 * num_edge:], params["w_dst"], params["b_dst"])
    h_pos_edge = jax.nn.relu(h_src + h_pos_dst)
    h_neg_edge = jax.nn.relu(jnp.tile(h_src, (neg_samples, 1)) + h_neg_dst)
    return (lin(h_pos_edge, params["w_out"], params["b_out"]),
            lin(h_neg_edge, params["w_out"], params["b_out"]))


def _init_params(key, dim_in):
    """Deterministic PyTorch-Linear-style init: U(-1/sqrt(in), 1/sqrt(in))."""
    ks = jax.random.split(key, 6)
    bound = 1.0 / (dim_in ** 0.5)
    u = lambda k, shape: jax.random.uniform(k, shape, jnp.float32, -bound, bound)
    return {
        "w_src": u(ks[0], (dim_in, dim_in)), "b_src": u(ks[1], (dim_in,)),
        "w_dst": u(ks[2], (dim_in, dim_in)), "b_dst": u(ks[3], (dim_in,)),
        "w_out": u(ks[4], (1, dim_in)),      "b_out": u(ks[5], (1,)),
    }


def _run_case(key, *, dim_in, num_edge, neg_samples, c,
              matmul_dtype, block_m, atol, rtol):
    N = (neg_samples + 2) * num_edge
    k_h, k_p = jax.random.split(key)
    # Keep points well inside the Poincare ball.
    h = 0.1 * jax.random.normal(k_h, (N, dim_in), jnp.float32)
    params = _init_params(k_p, dim_in)

    pos, neg = edge_predictor_forward(h, params, c=c, neg_samples=neg_samples,
                                      matmul_dtype=matmul_dtype, block_m=block_m)
    pos = jax.block_until_ready(pos)
    neg = jax.block_until_ready(neg)

    ref_pos, ref_neg = _reference_forward(h, params, c=c, neg_samples=neg_samples)
    assert pos.shape == (num_edge, 1)
    assert neg.shape == (neg_samples * num_edge, 1)
    assert jnp.allclose(pos, ref_pos, atol=atol, rtol=rtol), (
        float(jnp.max(jnp.abs(pos - ref_pos))))
    assert jnp.allclose(neg, ref_neg, atol=atol, rtol=rtol), (
        float(jnp.max(jnp.abs(neg - ref_neg))))


if __name__ == "__main__":
    key = jax.random.PRNGKey(0)
    k1, k2, k3, k4 = jax.random.split(key, 4)

    # 1) Small single-block case, full-f32 path (h stays f32), tight tolerance.
    _run_case(k1, dim_in=32, num_edge=8, neg_samples=1, c=1.0,
              matmul_dtype=jnp.float32, block_m=None, atol=1e-5, rtol=1e-5)

    # 2) Blocked/pipelined case (grid=(2,), TM=128, neg_samples=2),
    #    bf16 h + bf16 MXU operands with f32 accumulation.
    _run_case(k2, dim_in=32, num_edge=256, neg_samples=2, c=1.0,
              matmul_dtype=jnp.bfloat16, block_m=128, atol=2e-2, rtol=2e-2)

    # 3) Default bf16 path at a different curvature.
    _run_case(k3, dim_in=32, num_edge=8, neg_samples=1, c=0.5,
              matmul_dtype=jnp.bfloat16, block_m=None, atol=2e-2, rtol=2e-2)

    # 4) Non-divisible num_edge exercises the cdiv + padded-tail-tile path.
    _run_case(k4, dim_in=32, num_edge=200, neg_samples=3, c=1.0,
              matmul_dtype=jnp.bfloat16, block_m=None, atol=2e-2, rtol=2e-2)

    print("KERNEL_OK")
</pallas_src>

<mosaic_0001>
module attributes {stable_mosaic.version = 11 : i64} {
  func.func @_edge_predictor_kernel(%arg0: i32, %arg1: memref<3x8x32xf32, #tpu.memory_space<vmem>>, %arg2: memref<32x32xf32, #tpu.memory_space<vmem>>, %arg3: memref<32x32xf32, #tpu.memory_space<vmem>>, %arg4: memref<1x32xf32, #tpu.memory_space<vmem>>, %arg5: memref<1x32xf32, #tpu.memory_space<vmem>>, %arg6: memref<1x1xf32, #tpu.memory_space<smem>>, %arg7: memref<2x8xf32, #tpu.memory_space<vmem>>) attributes {dimension_semantics = [#tpu.dimension_semantics<parallel>], iteration_bounds = array<i64: 1>, scalar_prefetch = 0 : i64, scratch_operands = 0 : i64, tpu.core_type = #tpu.core_type<tc>, window_params = [{transform_indices = @transform_0, window_bounds = array<i64: 3, 8, 32>}, {pipeline_mode = #tpu.pipeline_mode<synchronous>, transform_indices = @transform_1, window_bounds = array<i64: 32, 32>}, {pipeline_mode = #tpu.pipeline_mode<synchronous>, transform_indices = @transform_2, window_bounds = array<i64: 32, 32>}, {pipeline_mode = #tpu.pipeline_mode<synchronous>, transform_indices = @transform_3, window_bounds = array<i64: 1, 32>}, {pipeline_mode = #tpu.pipeline_mode<synchronous>, transform_indices = @transform_4, window_bounds = array<i64: 1, 32>}, {transform_indices = @transform_5, window_bounds = array<i64: 1, 1>}, {transform_indices = @transform_6, window_bounds = array<i64: 2, 8>}]} {
    %c0 = arith.constant 0 : index
    %c0_0 = arith.constant 0 : index
    %c0_1 = arith.constant 0 : index
    %0 = vector.load %arg1[%c0, %c0_0, %c0_1] : memref<3x8x32xf32, #tpu.memory_space<vmem>>, vector<3x8x32xf32>
    %cst = arith.constant 1.000000e+00 : f32
    %cst_2 = arith.constant 5.000000e-01 : f32
    %1 = math.powf %cst, %cst_2 : f32
    %2 = arith.mulf %0, %0 : vector<3x8x32xf32>
    %cst_3 = arith.constant dense<0.000000e+00> : vector<3x8xf32>
    %3 = vector.multi_reduction <add>, %2, %cst_3 [2] : vector<3x8x32xf32> to vector<3x8xf32>
    %4 = vector.shape_cast %3 : vector<3x8xf32> to vector<3x8x1xf32>
    %5 = math.sqrt %4 : vector<3x8x1xf32>
    %cst_4 = arith.constant 1.000000e-15 : f32
    %6 = vector.broadcast %cst_4 : f32 to vector<3x8x1xf32>
    %7 = arith.maximumf %5, %6 : vector<3x8x1xf32>
    %8 = vector.broadcast %1 : f32 to vector<3x8x1xf32>
    %9 = arith.mulf %8, %7 : vector<3x8x1xf32>
    %cst_5 = arith.constant -0.999998986 : f32
    %cst_6 = arith.constant 0.999998986 : f32
    %10 = vector.broadcast %cst_5 : f32 to vector<3x8x1xf32>
    %11 = arith.maximumf %10, %9 : vector<3x8x1xf32>
    %12 = vector.broadcast %cst_6 : f32 to vector<3x8x1xf32>
    %13 = arith.minimumf %12, %11 : vector<3x8x1xf32>
    %cst_7 = arith.constant 1.000000e+00 : f32
    %14 = vector.broadcast %cst_7 : f32 to vector<3x8x1xf32>
    %15 = arith.addf %14, %13 : vector<3x8x1xf32>
    %cst_8 = arith.constant 1.000000e+00 : f32
    %16 = vector.broadcast %cst_8 : f32 to vector<3x8x1xf32>
    %17 = arith.subf %16, %13 : vector<3x8x1xf32>
    %18 = tpu.reciprocal %17 : vector<3x8x1xf32> -> vector<3x8x1xf32>
    %19 = arith.mulf %15, %18 : vector<3x8x1xf32>
    %20 = math.log %19 : vector<3x8x1xf32>
    %cst_9 = arith.constant 5.000000e-01 : f32
    %21 = vector.broadcast %cst_9 : f32 to vector<3x8x1xf32>
    %22 = arith.mulf %21, %20 : vector<3x8x1xf32>
    %23 = vector.broadcast %1 : f32 to vector<3x8x1xf32>
    %24 = arith.mulf %23, %7 : vector<3x8x1xf32>
    %25 = tpu.reciprocal %24 : vector<3x8x1xf32> -> vector<3x8x1xf32>
    %26 = arith.mulf %22, %25 : vector<3x8x1xf32>
    %27 = vector.broadcast %26 : vector<3x8x1xf32> to vector<3x8x32xf32>
    %28 = arith.mulf %27, %0 : vector<3x8x32xf32>
    %29 = vector.extract_strided_slice %28 {offsets = [0, 0, 0], sizes = [1, 8, 32], strides = [1, 1, 1]} : vector<3x8x32xf32> to vector<1x8x32xf32>
    %30 = vector.shape_cast %29 : vector<1x8x32xf32> to vector<8x32xf32>
    %31 = vector.extract_strided_slice %28 {offsets = [1, 0, 0], sizes = [2, 8, 32], strides = [1, 1, 1]} : vector<3x8x32xf32> to vector<2x8x32xf32>
    %32 = vector.shape_cast %31 : vector<2x8x32xf32> to vector<16x32xf32>
    %c0_10 = arith.constant 0 : index
    %c0_11 = arith.constant 0 : index
    %33 = vector.load %arg2[%c0_10, %c0_11] : memref<32x32xf32, #tpu.memory_space<vmem>>, vector<32x32xf32>
    %cst_12 = arith.constant dense<0.000000e+00> : vector<8x32xf32>
    %34 = tpu.matmul %30, %33, %cst_12 {dimension_numbers = #tpu.dot_dimension_numbers<[1], [0], [0], [1], [0, 0, 1, 1], [], []>} : vector<8x32xf32>, vector<32x32xf32>, vector<8x32xf32> -> vector<8x32xf32>
    %c0_13 = arith.constant 0 : index
    %c0_14 = arith.constant 0 : index
    %35 = vector.load %arg3[%c0_13, %c0_14] : memref<32x32xf32, #tpu.memory_space<vmem>>, vector<32x32xf32>
    %cst_15 = arith.constant dense<0.000000e+00> : vector<16x32xf32>
    %36 = tpu.matmul %32, %35, %cst_15 {dimension_numbers = #tpu.dot_dimension_numbers<[1], [0], [0], [1], [0, 0, 1, 1], [], []>} : vector<16x32xf32>, vector<32x32xf32>, vector<16x32xf32> -> vector<16x32xf32>
    %37 = vector.shape_cast %36 : vector<16x32xf32> to vector<2x8x32xf32>
    %38 = vector.shape_cast %34 : vector<8x32xf32> to vector<1x8x32xf32>
    %39 = vector.broadcast %38 : vector<1x8x32xf32> to vector<2x8x32xf32>
    %40 = arith.addf %39, %37 : vector<2x8x32xf32>
    %c0_16 = arith.constant 0 : index
    %c0_17 = arith.constant 0 : index
    %41 = vector.load %arg4[%c0_16, %c0_17] : memref<1x32xf32, #tpu.memory_space<vmem>>, vector<1x32xf32>
    %42 = vector.shape_cast %41 : vector<1x32xf32> to vector<1x1x32xf32>
    %43 = vector.broadcast %42 : vector<1x1x32xf32> to vector<2x8x32xf32>
    %44 = arith.addf %40, %43 : vector<2x8x32xf32>
    %cst_18 = arith.constant 0.000000e+00 : f32
    %45 = vector.broadcast %cst_18 : f32 to vector<2x8x32xf32>
    %46 = arith.maximumf %44, %45 : vector<2x8x32xf32>
    %c0_19 = arith.constant 0 : index
    %c0_20 = arith.constant 0 : index
    %47 = vector.load %arg5[%c0_19, %c0_20] : memref<1x32xf32, #tpu.memory_space<vmem>>, vector<1x32xf32>
    %c0_21 = arith.constant 0 : index
    %c0_22 = arith.constant 0 : index
    %48 = memref.load %arg6[%c0_21, %c0_22] : memref<1x1xf32, #tpu.memory_space<smem>>
    %49 = vector.shape_cast %47 : vector<1x32xf32> to vector<1x1x32xf32>
    %50 = vector.broadcast %49 : vector<1x1x32xf32> to vector<2x8x32xf32>
    %51 = arith.mulf %46, %50 : vector<2x8x32xf32>
    %cst_23 = arith.constant dense<0.000000e+00> : vector<2x8xf32>
    %52 = vector.multi_reduction <add>, %51, %cst_23 [2] : vector<2x8x32xf32> to vector<2x8xf32>
    %53 = vector.broadcast %48 : f32 to vector<2x8xf32>
    %54 = arith.addf %52, %53 : vector<2x8xf32>
    %c0_24 = arith.constant 0 : index
    %c0_25 = arith.constant 0 : index
    %55 = vector.load %arg7[%c0_24, %c0_25] : memref<2x8xf32, #tpu.memory_space<vmem>>, vector<2x8xf32>
    tpu.vector_store %arg7[%c0_24, %c0_25], %54 {strides = array<i32>} : memref<2x8xf32, #tpu.memory_space<vmem>>, vector<2x8xf32>,
    return
  }
  func.func @transform_0(%arg0: i32) -> (i32, i32, i32) {
    %c0_i32 = arith.constant 0 : i32
    %c0_i32_0 = arith.constant 0 : i32
    %c0_i32_1 = arith.constant 0 : i32
    return %c0_i32, %arg0, %c0_i32_0 : i32, i32, i32
  }
  func.func @transform_1(%arg0: i32) -> (i32, i32) {
    %c0_i32 = arith.constant 0 : i32
    %c0_i32_0 = arith.constant 0 : i32
    %c0_i32_1 = arith.constant 0 : i32
    return %c0_i32, %c0_i32_0 : i32, i32
  }
  func.func @transform_2(%arg0: i32) -> (i32, i32) {
    %c0_i32 = arith.constant 0 : i32
    %c0_i32_0 = arith.constant 0 : i32
    %c0_i32_1 = arith.constant 0 : i32
    return %c0_i32, %c0_i32_0 : i32, i32
  }
  func.func @transform_3(%arg0: i32) -> (i32, i32) {
    %c0_i32 = arith.constant 0 : i32
    %c0_i32_0 = arith.constant 0 : i32
    %c0_i32_1 = arith.constant 0 : i32
    return %c0_i32, %c0_i32_0 : i32, i32
  }
  func.func @transform_4(%arg0: i32) -> (i32, i32) {
    %c0_i32 = arith.constant 0 : i32
    %c0_i32_0 = arith.constant 0 : i32
    %c0_i32_1 = arith.constant 0 : i32
    return %c0_i32, %c0_i32_0 : i32, i32
  }
  func.func @transform_5(%arg0: i32) -> (i32, i32) {
    %c0_i32 = arith.constant 0 : i32
    %c0_i32_0 = arith.constant 0 : i32
    %c0_i32_1 = arith.constant 0 : i32
    return %c0_i32, %c0_i32_0 : i32, i32
  }
  func.func @transform_6(%arg0: i32) -> (i32, i32) {
    %c0_i32 = arith.constant 0 : i32
    %c0_i32_0 = arith.constant 0 : i32
    return %c0_i32, %arg0 : i32, i32
  }
}

</mosaic_0001>

<llo_original>
// kernel: tpu_custom_call.1
$region0: #{tpu_custom_call.1}
  #allocation0 [shape = 'u32[]', space=smem, size = 0x4, offset = 0x4, fixed_abs, tag = 'smem constant byte address 0x4 - core index']
  #allocation1 [shape = 'u32[144,128]{1,0:T(1,128)}', space=vmem, size = 0x12000, scoped, tag = 'internal scratch']
  #allocation2 [shape = 'f32[1,1]{1,0:T(1,128)S(6)}', space=smem, size = 0x200, scoped, tag = 'scoped memory for tpu_custom_call.1']
  %s0 = inlined_call_operand.hbm [shape: f32[3,8,32], index: 0, kind: input, shape index: {}]
  %s1 = inlined_call_operand.hbm [shape: f32[32,32], index: 1, kind: input, shape index: {}]
  %s2 = inlined_call_operand.hbm [shape: f32[32,32], index: 2, kind: input, shape index: {}]
  %s3 = inlined_call_operand.hbm [shape: f32[1,32], index: 3, kind: input, shape index: {}]
  %s4 = inlined_call_operand.hbm [shape: f32[1,32], index: 4, kind: input, shape index: {}]
  %s5 = inlined_call_operand.<no memory space> [shape: f32[1,1], index: 5, kind: input, shape index: {}]
  %s6 = inlined_call_operand.hbm [shape: f32[2,8], index: 6, kind: output, shape index: {}]
  %s7 = sld [smem:[#allocation0]]
  $region54: #{tpu_custom_call.1} parent=0
    _
  %s9 = ssub.s32 1, %s7
  %s10 = scalar_select 0, %s9, %s7
  %11 = sst [smem:[#allocation2]] %s5
  $region1: #{tpu_custom_call.1} parent=0
    #allocation3 [shape = 'u8[12288]{0}', space=vmem, size = 0x3000, scoped, tag = 'input window, operand 0, single buffered']
    #allocation4 [shape = 's32[1]{0}', space=sflag, size = 0x4, scoped, tag = 'scoped memory for tpu_custom_call.1']
    #allocation5 [shape = 's32[1]{0}', space=sflag, size = 0x4, scoped, tag = 'scoped memory for tpu_custom_call.1']
    #allocation6 [shape = 'u8[16384]{0}', space=vmem, size = 0x4000, scoped, tag = 'input window, operand 1, single buffered']
    #allocation7 [shape = 's32[1]{0}', space=sflag, size = 0x4, scoped, tag = 'scoped memory for tpu_custom_call.1']
    #allocation8 [shape = 'u8[16384]{0}', space=vmem, size = 0x4000, scoped, tag = 'input window, operand 2, single buffered']
    #allocation9 [shape = 'u8[512]{0}', space=vmem, size = 0x400, scoped, tag = 'input window, operand 3, single buffered']
    #allocation10 [shape = 's32[1]{0}', space=sflag, size = 0x4, scoped, tag = 'scoped memory for tpu_custom_call.1']
    #allocation11 [shape = 'u8[512]{0}', space=vmem, size = 0x400, scoped, tag = 'input window, operand 4, single buffered']
    #allocation12 [shape = 'u8[1024]{0}', space=vmem, size = 0x400, scoped, tag = 'output window, operand 0, single buffered']
    %12 = vsyncpa [#allocation4], 0
    %13 = vsyncpa [#allocation7], 0
    %14 = vsyncpa [#allocation10], 0
    %15 = vsyncpa [#allocation5], 0
    // Predicated region
    $region2: #{tpu_custom_call.1} parent=1 // pred_check
      _
    $region3: #{tpu_custom_call.1} parent=1 // pred_check_branch
      %17 = sbr.rel (0) target = $region5
    $region4: #{tpu_custom_call.1} parent=1 // pred_region
      %s19 = ssub.s32 384, 384
      %20 = vsyncadd [#allocation4], %s19
      %s21 = sshll.u32 [#allocation3], 4
      %s22 = int_to_ptr.vmem [resolvable:$true] %s21
      %27 = dma.hbm_to_vmem [thread:$0]  %s0, 384, %s22, [#allocation4], 128, 128, 8
    $region5: #{tpu_custom_call.1} parent=1 // pred_fallthru
      _
    // Predicated region
    $region6: #{tpu_custom_call.1} parent=1 // pred_check
      _
    $region7: #{tpu_custom_call.1} parent=1 // pred_check_branch
      %29 = sbr.rel (0) target = $region9
    $region8: #{tpu_custom_call.1} parent=1 // pred_region
      %s31 = ssub.s32 512, 512
      %32 = vsyncadd [#allocation7], %s31
      %s33 = sshll.u32 [#allocation6], 4
      %s34 = int_to_ptr.vmem [resolvable:$true] %s33
      %39 = dma.hbm_to_vmem [thread:$0]  %s1, 512, %s34, [#allocation7], 128, 128, 8
    $region9: #{tpu_custom_call.1} parent=1 // pred_fallthru
      _
    // Predicated region
    $region10: #{tpu_custom_call.1} parent=1 // pred_check
      _
    $region11: #{tpu_custom_call.1} parent=1 // pred_check_branch
      %41 = sbr.rel (0) target = $region13
    $region12: #{tpu_custom_call.1} parent=1 // pred_region
      %s43 = ssub.s32 512, 512
      %44 = vsyncadd [#allocation7], %s43
      %s45 = sshll.u32 [#allocation8], 4
      %s46 = int_to_ptr.vmem [resolvable:$true] %s45
      %51 = dma.hbm_to_vmem [thread:$0]  %s2, 512, %s46, [#allocation7], 128, 128, 8
    $region13: #{tpu_custom_call.1} parent=1 // pred_fallthru
      _
    // Predicated region
    $region14: #{tpu_custom_call.1} parent=1 // pred_check
      _
    $region15: #{tpu_custom_call.1} parent=1 // pred_check_branch
      %53 = sbr.rel (0) target = $region17
    $region16: #{tpu_custom_call.1} parent=1 // pred_region
      %s55 = ssub.s32 16, 16
      %56 = vsyncadd [#allocation10], %s55
      %s58 = sshll.u32 [#allocation9], 4
      %s59 = int_to_ptr.vmem [resolvable:$true] %s58
      %61 = dma.hbm_to_vmem [thread:$0]  %s3, 16, %s59, [#allocation10]
    $region17: #{tpu_custom_call.1} parent=1 // pred_fallthru
      _
    // Predicated region
    $region18: #{tpu_custom_call.1} parent=1 // pred_check
      _
    $region19: #{tpu_custom_call.1} parent=1 // pred_check_branch
      %63 = sbr.rel (0) target = $region21
    $region20: #{tpu_custom_call.1} parent=1 // pred_region
      %s65 = ssub.s32 16, 16
      %66 = vsyncadd [#allocation10], %s65
      %s68 = sshll.u32 [#allocation11], 4
      %s69 = int_to_ptr.vmem [resolvable:$true] %s68
      %71 = dma.hbm_to_vmem [thread:$0]  %s4, 16, %s69, [#allocation10]
    $region21: #{tpu_custom_call.1} parent=1 // pred_fallthru
      _
    // Predicated region
    $region22: #{tpu_custom_call.1} parent=1 // pred_check
      _
    $region23: #{tpu_custom_call.1} parent=1 // pred_check_branch
      %73 = sbr.rel (0) target = $region25
    $region24: #{tpu_custom_call.1} parent=1 // pred_region
      _
    $region25: #{tpu_custom_call.1} parent=1 // pred_fallthru
      _
    // Predicated region
    $region26: #{tpu_custom_call.1} parent=1 // pred_check
      _
    $region27: #{tpu_custom_call.1} parent=1 // pred_check_branch
      %75 = sbr.rel (0) target = $region29
    $region28: #{tpu_custom_call.1} parent=1 // pred_region
      %76 = dma.done [#allocation4], 384
    $region29: #{tpu_custom_call.1} parent=1 // pred_fallthru
      _
    // Predicated region
    $region30: #{tpu_custom_call.1} parent=1 // pred_check
      _
    $region31: #{tpu_custom_call.1} parent=1 // pred_check_branch
      %78 = sbr.rel (0) target = $region33
    $region32: #{tpu_custom_call.1} parent=1 // pred_region
      %79 = dma.done [#allocation7], 512
    $region33: #{tpu_custom_call.1} parent=1 // pred_fallthru
      _
    // Predicated region
    $region34: #{tpu_custom_call.1} parent=1 // pred_check
      _
    $region35: #{tpu_custom_call.1} parent=1 // pred_check_branch
      %81 = sbr.rel (0) target = $region37
    $region36: #{tpu_custom_call.1} parent=1 // pred_region
      %82 = dma.done [#allocation7], 512
    $region37: #{tpu_custom_call.1} parent=1 // pred_fallthru
      _
    // Predicated region
    $region38: #{tpu_custom_call.1} parent=1 // pred_check
      _
    $region39: #{tpu_custom_call.1} parent=1 // pred_check_branch
      %84 = sbr.rel (0) target = $region41
    $region40: #{tpu_custom_call.1} parent=1 // pred_region
      %85 = dma.done [#allocation10], 16
    $region41: #{tpu_custom_call.1} parent=1 // pred_fallthru
      _
    // Predicated region
    $region42: #{tpu_custom_call.1} parent=1 // pred_check
      _
    $region43: #{tpu_custom_call.1} parent=1 // pred_check_branch
      %87 = sbr.rel (0) target = $region45
    $region44: #{tpu_custom_call.1} parent=1 // pred_region
      %88 = dma.done [#allocation10], 16
    $region45: #{tpu_custom_call.1} parent=1 // pred_fallthru
      _
    %v89 = vld [vmem:[#allocation3] sm:$0xff]
    %v90 = vld [vmem:[#allocation3 + $0x8] sm:$0xff]
    %v91 = vld [vmem:[#allocation3 + $0x10] sm:$0xff]
    %v92 = vmul.f32 %v89, %v89
    %v93 = vmul.f32 %v90, %v90
    %v94 = vmul.f32 %v91, %v91
    %vm95 = vcmask 261120
    %v96 = vsel %vm95, %v92, 0.0
    %97 = vadd.xlane.f32.xlu0 %v96
    %v98 = vpop.xlane.xlu0 %97
    %v99 = vsel %vm95, %v93, 0.0
    %100 = vadd.xlane.f32.xlu0 %v99
    %v101 = vpop.xlane.xlu0 %100
    %v102 = vsel %vm95, %v94, 0.0
    %103 = vadd.xlane.f32.xlu0 %v102
    %v104 = vpop.xlane.xlu0 %103
    %v105 = vrsqrt.pop %v98
    %v106 = vmul.f32 %v98, %v105
    %vm107 = vcmp.eq.f32.partialorder %v98, inf
    %v108 = vsel %vm107, %v98, %v106
    %vm109 = vcmp.eq.f32.partialorder %v98, 0.0
    %v110 = vand.u32 %v98, 2147483648
    %v111 = vsel %vm109, %v110, %v108
    %v112 = vrsqrt.pop %v101
    %v113 = vmul.f32 %v101, %v112
    %vm114 = vcmp.eq.f32.partialorder %v101, inf
    %v115 = vsel %vm114, %v101, %v113
    %vm116 = vcmp.eq.f32.partialorder %v101, 0.0
    %v117 = vand.u32 %v101, 2147483648
    %v118 = vsel %vm116, %v117, %v115
    %v119 = vrsqrt.pop %v104
    %v120 = vmul.f32 %v104, %v119
    %vm121 = vcmp.eq.f32.partialorder %v104, inf
    %v122 = vsel %vm121, %v104, %v120
    %vm123 = vcmp.eq.f32.partialorder %v104, 0.0
    %v124 = vand.u32 %v104, 2147483648
    %v125 = vsel %vm123, %v124, %v122
    %v126 = vmax.f32 %v111, 1e-15
    %v127 = vmax.f32 %v118, 1e-15
    %v128 = vmax.f32 %v125, 1e-15
    %v129 = vmax.f32 %v126, -0.999999
    %v130 = vmax.f32 %v127, -0.999999
    %v131 = vmax.f32 %v128, -0.999999
    %v132 = vmin.f32 %v129, 0.999999
    %v133 = vmin.f32 %v130, 0.999999
    %v134 = vmin.f32 %v131, 0.999999
    %v135 = vadd.f32 %v132, 1.0
    %v136 = vadd.f32 %v133, 1.0
    %v137 = vadd.f32 %v134, 1.0
    %v138 = vsub.f32 1.0, %v132
    %v139 = vsub.f32 1.0, %v133
    %v140 = vsub.f32 1.0, %v134
    %v141 = vrcp.pop %v138
    %v142 = vrcp.pop %v139
    %v143 = vrcp.pop %v140
    %v144 = vmul.f32 %v135, %v141
    %v145 = vmul.f32 %v136, %v142
    %v146 = vmul.f32 %v137, %v143
    %v147 = vlog2.pop %v144
    %v148 = vmul.f32 %v147, 0.6931472
    %v149 = vlog2.pop %v145
    %v150 = vmul.f32 %v149, 0.6931472
    %v151 = vlog2.pop %v146
    %v152 = vmul.f32 %v151, 0.6931472
    %v153 = vmul.f32 %v148, 0.5
    %v154 = vmul.f32 %v150, 0.5
    %v155 = vmul.f32 %v152, 0.5
    %v156 = vrcp.pop %v126
    %v157 = vrcp.pop %v127
    %v158 = vrcp.pop %v128
    %v159 = vmul.f32 %v153, %v156
    %v160 = vmul.f32 %v154, %v157
    %v161 = vmul.f32 %v155, %v158
    %v162 = vmul.f32 %v159, %v89
    %v163 = vmul.f32 %v160, %v90
    %v164 = vmul.f32 %v161, %v91
    %v165 = vld [vmem:[#allocation6] sm:$0xff]
    %v166 = vld [vmem:[#allocation6 + $0x8] sm:$0xff]
    %v167 = vld [vmem:[#allocation6 + $0x10] sm:$0xff]
    %v168 = vld [vmem:[#allocation6 + $0x18] sm:$0xff]
    %v170 = vsel %vm95, %v162, 0
    %172 = vmatprep.subr.mxu0 0.0
    %173 = vmatpush1.msra.mxu0 %v165
    %174 = vmatprep.subr.mxu0 0.0
    %175 = vmatpush1.msra.mxu0 %v166
    %176 = vmatprep.subr.mxu0 0.0
    %177 = vmatpush1.msra.mxu0 %v167
    %178 = vmatprep.subr.mxu0 0.0
    %179 = vmatpush1.msra.mxu0 %v168
    %180 = vmatprep.subr.mxu0 0.0
    %181 = vmatpush1.msra.mxu0 0.0
    %182 = vmatprep.subr.mxu0 0.0
    %183 = vmatpush1.msra.mxu0 0.0
    %184 = vmatprep.subr.mxu0 0.0
    %185 = vmatpush1.msra.mxu0 0.0
    %186 = vmatprep.subr.mxu0 0.0
    %187 = vmatpush1.msra.mxu0 0.0
    %188 = vmatprep.subr.mxu0 0.0
    %189 = vmatpush1.msra.mxu0 0.0
    %190 = vmatprep.subr.mxu0 0.0
    %191 = vmatpush1.msra.mxu0 0.0
    %192 = vmatprep.subr.mxu0 0.0
    %193 = vmatpush1.msra.mxu0 0.0
    %194 = vmatprep.subr.mxu0 0.0
    %195 = vmatpush1.msra.mxu0 0.0
    %196 = vmatprep.subr.mxu0 0.0
    %197 = vmatpush1.msra.mxu0 0.0
    %198 = vmatprep.subr.mxu0 0.0
    %199 = vmatpush1.msra.mxu0 0.0
    %200 = vmatprep.subr.mxu0 0.0
    %201 = vmatpush1.msra.mxu0 0.0
    %202 = vmatprep.subr.mxu0 0.0
    %203 = vmatpush1.msra.mxu0 0.0
    %204 = vmatprep.subr.mxu0 0.0
    %205 = vmatpush1.msra.mxu0 0.0
    %206 = vmatprep.subr.mxu0 0.0
    %207 = vmatpush1.msra.mxu0 0.0
    %208 = vmatprep.subr.mxu0 0.0
    %209 = vmatpush1.msra.mxu0 0.0
    %210 = vmatprep.subr.mxu0 0.0
    %211 = vmatpush1.msra.mxu0 0.0
    %212 = vmatprep.subr.mxu0 0.0
    %213 = vmatpush1.msra.mxu0 0.0
    %214 = vmatprep.subr.mxu0 0.0
    %215 = vmatpush1.msra.mxu0 0.0
    %216 = vmatprep.subr.mxu0 0.0
    %217 = vmatpush1.msra.mxu0 0.0
    %218 = vmatprep.subr.mxu0 0.0
    %219 = vmatpush1.msra.mxu0 0.0
    %220 = vmatprep.subr.mxu0 0.0
    %221 = vmatpush1.msra.mxu0 0.0
    %222 = vmatprep.subr.mxu0 0.0
    %223 = vmatpush1.msra.mxu0 0.0
    %224 = vmatprep.subr.mxu0 0.0
    %225 = vmatpush1.msra.mxu0 0.0
    %226 = vmatprep.subr.mxu0 0.0
    %227 = vmatpush1.msra.mxu0 0.0
    %228 = vmatprep.subr.mxu0 0.0
    %229 = vmatpush1.msra.mxu0 0.0
    %230 = vmatprep.subr.mxu0 0.0
    %231 = vmatpush1.msra.mxu0 0.0
    %232 = vmatprep.subr.mxu0 0.0
    %233 = vmatpush1.msra.mxu0 0.0
    %234 = vmatprep.subr.mxu0 0.0
    %235 = vmatpush1.msra.mxu0 0.0
    %236 = vmatprep.mubr.f32.mxu0 0.0
    %237 = vmatmul.mubr.f32.gmra.mrb[0].mxu0 %v170
    %v238 = vpop.f32.mrb[0].mxu0
    %v239 = vadd.f32 0.0, %v238
    %v240 = vpop.f32.mrb[0].mxu0
    %241 = vdwg.mxu0
    %v242 = vld [vmem:[#allocation8] sm:$0xff]
    %v243 = vld [vmem:[#allocation8 + $0x8] sm:$0xff]
    %v244 = vld [vmem:[#allocation8 + $0x10] sm:$0xff]
    %v245 = vld [vmem:[#allocation8 + $0x18] sm:$0xff]
    %v247 = vsel %vm95, %v163, 0
    %v250 = vsel %vm95, %v164, 0
    %252 = vmatprep.subr.mxu0 0.0
    %253 = vmatpush1.msra.mxu0 %v242
    %254 = vmatprep.subr.mxu0 0.0
    %255 = vmatpush1.msra.mxu0 %v243
    %256 = vmatprep.subr.mxu0 0.0
    %257 = vmatpush1.msra.mxu0 %v244
    %258 = vmatprep.subr.mxu0 0.0
    %259 = vmatpush1.msra.mxu0 %v245
    %260 = vmatprep.subr.mxu0 0.0
    %261 = vmatpush1.msra.mxu0 0.0
    %262 = vmatprep.subr.mxu0 0.0
    %263 = vmatpush1.msra.mxu0 0.0
    %264 = vmatprep.subr.mxu0 0.0
    %265 = vmatpush1.msra.mxu0 0.0
    %266 = vmatprep.subr.mxu0 0.0
    %267 = vmatpush1.msra.mxu0 0.0
    %268 = vmatprep.subr.mxu0 0.0
    %269 = vmatpush1.msra.mxu0 0.0
    %270 = vmatprep.subr.mxu0 0.0
    %271 = vmatpush1.msra.mxu0 0.0
    %272 = vmatprep.subr.mxu0 0.0
    %273 = vmatpush1.msra.mxu0 0.0
    %274 = vmatprep.subr.mxu0 0.0
    %275 = vmatpush1.msra.mxu0 0.0
    %276 = vmatprep.subr.mxu0 0.0
    %277 = vmatpush1.msra.mxu0 0.0
    %278 = vmatprep.subr.mxu0 0.0
    %279 = vmatpush1.msra.mxu0 0.0
    %280 = vmatprep.subr.mxu0 0.0
    %281 = vmatpush1.msra.mxu0 0.0
    %282 = vmatprep.subr.mxu0 0.0
    %283 = vmatpush1.msra.mxu0 0.0
    %284 = vmatprep.subr.mxu0 0.0
    %285 = vmatpush1.msra.mxu0 0.0
    %286 = vmatprep.subr.mxu0 0.0
    %287 = vmatpush1.msra.mxu0 0.0
    %288 = vmatprep.subr.mxu0 0.0
    %289 = vmatpush1.msra.mxu0 0.0
    %290 = vmatprep.subr.mxu0 0.0
    %291 = vmatpush1.msra.mxu0 0.0
    %292 = vmatprep.subr.mxu0 0.0
    %293 = vmatpush1.msra.mxu0 0.0
    %294 = vmatprep.subr.mxu0 0.0
    %295 = vmatpush1.msra.mxu0 0.0
    %296 = vmatprep.subr.mxu0 0.0
    %297 = vmatpush1.msra.mxu0 0.0
    %298 = vmatprep.subr.mxu0 0.0
    %299 = vmatpush1.msra.mxu0 0.0
    %300 = vmatprep.subr.mxu0 0.0
    %301 = vmatpush1.msra.mxu0 0.0
    %302 = vmatprep.subr.mxu0 0.0
    %303 = vmatpush1.msra.mxu0 0.0
    %304 = vmatprep.subr.mxu0 0.0
    %305 = vmatpush1.msra.mxu0 0.0
    %306 = vmatprep.subr.mxu0 0.0
    %307 = vmatpush1.msra.mxu0 0.0
    %308 = vmatprep.subr.mxu0 0.0
    %309 = vmatpush1.msra.mxu0 0.0
    %310 = vmatprep.subr.mxu0 0.0
    %311 = vmatpush1.msra.mxu0 0.0
    %312 = vmatprep.subr.mxu0 0.0
    %313 = vmatpush1.msra.mxu0 0.0
    %314 = vmatprep.subr.mxu0 0.0
    %315 = vmatpush1.msra.mxu0 0.0
    %316 = vmatprep.mubr.f32.mxu0 0.0
    %317 = vmatmul.mubr.f32.gmra.mrb[0].mxu0 %v247
    %v318 = vpop.f32.mrb[0].mxu0
    %v319 = vadd.f32 0.0, %v318
    %v320 = vpop.f32.mrb[0].mxu0
    %321 = vmatprep.mubr.f32.mxu0 0.0
    %322 = vmatmul.mubr.f32.gmra.mrb[0].mxu0 %v250
    %v323 = vpop.f32.mrb[0].mxu0
    %v324 = vadd.f32 0.0, %v323
    %v325 = vpop.f32.mrb[0].mxu0
    %326 = vdwg.mxu0
    %v327 = vadd.f32 %v239, %v319
    %v328 = vadd.f32 %v239, %v324
    %v329 = vld [vmem:[#allocation9] sm:$0x1]
    %v331 = vlaneseq
    %v332 = vshrl.u32 %v331, 7
    %v333 = vsub.s32 0, %v332
    %v334 = vrot.slane %v329, %v333
    %v336 = vadd.f32 %v327, %v334
    %v337 = vadd.f32 %v328, %v334
    %v338 = vmax.f32 %v336, 0.0
    %v339 = vmax.f32 %v337, 0.0
    %v340 = vld [vmem:[#allocation11] sm:$0x1]
    %s341 = sld [smem:[#allocation2]]
    %v343 = vlaneseq
    %v344 = vshrl.u32 %v343, 7
    %v345 = vsub.s32 0, %v344
    %v346 = vrot.slane %v340, %v345
    %v348 = vmul.f32 %v338, %v346
    %v349 = vmul.f32 %v339, %v346
    %v350 = vsel %vm95, %v348, 0.0
    %351 = vadd.xlane.f32.xlu0 %v350
    %v352 = vpop.xlane.xlu0 %351
    %v353 = vsel %vm95, %v349, 0.0
    %354 = vadd.xlane.f32.xlu0 %v353
    %v355 = vpop.xlane.xlu0 %354
    %v356 = vstv %s341
    %v357 = vadd.f32 %v352, %v356
    %v358 = vadd.f32 %v355, %v356
    %v361 = vlaneseq
    %v362 = vand.u32 %v361, 127
    %v363 = vlaneseq
    %v364 = vshrl.u32 %v363, 7
    %v365 = vsub.s32 %v362, %v364
    %v366 = vrot.slane %v357, %v365
    %v367 = vlaneseq
    %v368 = vshrl.u32 %v367, 7
    %v369 = vsub.s32 %v362, %v368
    %v370 = vrot.slane %v358, %v369
    %vm371 = vcmask 1041409
    %v372 = vsel %vm371, %v370, %v366
    %vm374 = vcmask 58368
    %375 = vst.msk [vmem:[#allocation12] sm:$0x3] %vm374, %v372
    // Predicated region
    $region46: #{tpu_custom_call.1} parent=1 // pred_check
      _
    $region47: #{tpu_custom_call.1} parent=1 // pred_check_branch
      %377 = sbr.rel (0) target = $region49
    $region48: #{tpu_custom_call.1} parent=1 // pred_region
      %s379 = ssub.s32 32, 32
      %380 = vsyncadd [#allocation5], %s379
      %s382 = sshll.u32 [#allocation12], 4
      %s383 = int_to_ptr.vmem [resolvable:$true] %s382
      %385 = dma.vmem_to_hbm [thread:$0]  %s383, 32, %s6, [#allocation5]
    $region49: #{tpu_custom_call.1} parent=1 // pred_fallthru
      _
    // Predicated region
    $region50: #{tpu_custom_call.1} parent=1 // pred_check
      _
    $region51: #{tpu_custom_call.1} parent=1 // pred_check_branch
      %387 = sbr.rel (0) target = $region53
    $region52: #{tpu_custom_call.1} parent=1 // pred_region
      %388 = dma.done [#allocation5], 32
    $region53: #{tpu_custom_call.1} parent=1 // pred_fallthru
      _
    %389 = vsyncpa [#allocation4], 1
    %390 = vsyncpa [#allocation7], 1
    %391 = vsyncpa [#allocation10], 1
    %392 = vsyncpa [#allocation5], 1

</llo_original>
